<compile_context>
chip_gen: v6e
topology: v6e:2x2x1
jax: 0.10.0
libtpu: 0.0.40
codegen_flags: <defaults>
</compile_context>

<pallas_src>
import functools

import jax
import jax.numpy as jnp
from jax.experimental import pallas as pl
from jax.experimental.pallas import tpu as pltpu


def _round_up(a, b):
    return (a + b - 1) // b * b


def mlp_kernel(x_ref, w1_ref, b1_ref, w2_ref, b2_ref, o_ref, *, compute_dtype):
    x = x_ref[...]
    if compute_dtype is not None:
        # Cast in-kernel: HBM traffic stays in the caller's dtype, MXU sees bf16.
        x = x.astype(compute_dtype)

    # fc1: (TM, F) @ (F, H) -> (TM, H), f32 MXU accumulation.
    h = jnp.dot(x, w1_ref[...], preferred_element_type=jnp.float32)
    h = h + b1_ref[...]              # b1_ref is (1, H); broadcasts over batch
    h = jnp.maximum(h, 0.0)          # ReLU on VPU

    # fc2: (TM, H) @ (H, O) -> (TM, O), f32 MXU accumulation.
    h = h.astype(w2_ref.dtype)       # no-op in f32 mode; bf16 feed otherwise
    out = jnp.dot(h, w2_ref[...], preferred_element_type=jnp.float32)
    out = out + b2_ref[...]          # b2_ref is (1, O)
    o_ref[...] = out.astype(o_ref.dtype)


@functools.partial(jax.jit, static_argnames=("tile_m", "compute_dtype"))
def linear_model_forward(x, w1, b1, w2, b2, *, tile_m=1024, compute_dtype=None):
    """x: (B, F); w1: (H, F); b1: (H,); w2: (O, H); b2: (O,). Returns (B, O).

    compute_dtype: if set (e.g. jnp.bfloat16) the matmul operands are fed to
    the MXU in that dtype (x cast in-kernel, weights cast once here) while
    accumulation stays f32. Output dtype matches the input x dtype.
    """
    out_dtype = x.dtype
    B, F = x.shape
    H = w1.shape[0]
    O = w2.shape[0]

    # One-time tiny weight prep (64 KiB each): canonical (K, N) MXU order.
    w1_t = w1.T                      # (F, H)
    w2_t = w2.T                      # (H, O)
    b1_2d = b1.reshape(1, H)
    b2_2d = b2.reshape(1, O)
    if compute_dtype is not None:
        w1_t = w1_t.astype(compute_dtype)
        w2_t = w2_t.astype(compute_dtype)

    # Batch tiling: big tiles (amortize ~0.35 us/step, deep DMA overlap) but
    # capped so large B gives >= 2 grid steps for v7x megacore sharding.
    sub = 16 if compute_dtype is not None else 8   # bf16 packs 2 rows/sublane
    tm = min(tile_m, _round_up(pl.cdiv(B, 2), sub))
    tm = max(tm, sub)
    if tm >= B:
        tm = B                        # single full-extent block: always legal
    grid_m = pl.cdiv(B, tm)           # ragged final block handled by Pallas

    itemsize = jnp.dtype(out_dtype).itemsize
    cost = pl.CostEstimate(
        flops=2 * B * F * H + 2 * B * H * O,
        transcendentals=0,
        bytes_accessed=(x.size * x.dtype.itemsize
                        + w1_t.size * w1_t.dtype.itemsize
                        + w2_t.size * w2_t.dtype.itemsize
                        + (H + O) * 4
                        + B * O * itemsize),
    )

    kernel = functools.partial(mlp_kernel, compute_dtype=compute_dtype)

    return pl.pallas_call(
        kernel,
        out_shape=jax.ShapeDtypeStruct((B, O), out_dtype),
        grid=(grid_m,),
        in_specs=[
            pl.BlockSpec((tm, F), lambda i: (i, 0)),   # x: tiled over batch
            pl.BlockSpec((F, H), lambda i: (0, 0)),    # w1^T: grid-invariant
            pl.BlockSpec((1, H), lambda i: (0, 0)),    # b1
            pl.BlockSpec((H, O), lambda i: (0, 0)),    # w2^T: grid-invariant
            pl.BlockSpec((1, O), lambda i: (0, 0)),    # b2
        ],
        out_specs=pl.BlockSpec((tm, O), lambda i: (i, 0)),
        compiler_params=pltpu.CompilerParams(
            dimension_semantics=("parallel",),         # megacore on v7x
        ),
        cost_estimate=cost,
    )(x, w1_t, b1_2d, w2_t, b2_2d)


if __name__ == "__main__":
    feature_dim = 128
    hidden_dim = 128
    out_dim = 10
    batch = 8

    key = jax.random.PRNGKey(0)
    kx, kw1, kb1, kw2, kb2, kx2 = jax.random.split(key, 6)

    x = jax.random.normal(kx, (batch, feature_dim), dtype=jnp.float32)

    # Deterministic init matching PyTorch nn.Linear parameter shapes:
    # fc1.weight (hidden, feature), fc1.bias (hidden,)
    # fc2.weight (10, hidden),      fc2.bias (10,)
    bound1 = 1.0 / (feature_dim ** 0.5)
    bound2 = 1.0 / (hidden_dim ** 0.5)
    w1 = jax.random.uniform(kw1, (hidden_dim, feature_dim),
                            minval=-bound1, maxval=bound1, dtype=jnp.float32)
    b1 = jax.random.uniform(kb1, (hidden_dim,),
                            minval=-bound1, maxval=bound1, dtype=jnp.float32)
    w2 = jax.random.uniform(kw2, (out_dim, hidden_dim),
                            minval=-bound2, maxval=bound2, dtype=jnp.float32)
    b2 = jax.random.uniform(kb2, (out_dim,),
                            minval=-bound2, maxval=bound2, dtype=jnp.float32)

    def ref_fn(xv):
        return jnp.maximum(xv @ w1.T + b1, 0.0) @ w2.T + b2

    # f32 exact path, single full-extent block.
    out = jax.block_until_ready(linear_model_forward(x, w1, b1, w2, b2))
    assert out.shape == (batch, out_dim)
    assert jnp.allclose(out, ref_fn(x), atol=1e-5, rtol=1e-5)

    # Multi-tile + ragged-final-block path (B=40 -> 2 grid steps, ragged tail).
    x_big = jax.random.normal(kx2, (40, feature_dim), dtype=jnp.float32)
    out_big = jax.block_until_ready(linear_model_forward(x_big, w1, b1, w2, b2))
    assert out_big.shape == (40, out_dim)
    assert jnp.allclose(out_big, ref_fn(x_big), atol=1e-5, rtol=1e-5)

    # bf16 MXU feed (f32 accumulation) — v5e/v7x fast path, looser tolerance.
    out_bf16 = jax.block_until_ready(
        linear_model_forward(x, w1, b1, w2, b2, compute_dtype=jnp.bfloat16))
    assert out_bf16.shape == (batch, out_dim)
    assert jnp.allclose(out_bf16, ref_fn(x), atol=5e-2, rtol=5e-2)

    print("KERNEL_OK")
</pallas_src>

<mosaic_0001>
module attributes {stable_mosaic.version = 11 : i64} {
  func.func @mlp_kernel(%arg0: i32, %arg1: memref<8x128xf32, #tpu.memory_space<vmem>>, %arg2: memref<128x128xf32, #tpu.memory_space<vmem>>, %arg3: memref<1x128xf32, #tpu.memory_space<vmem>>, %arg4: memref<128x10xf32, #tpu.memory_space<vmem>>, %arg5: memref<1x10xf32, #tpu.memory_space<vmem>>, %arg6: memref<8x10xf32, #tpu.memory_space<vmem>>) attributes {dimension_semantics = [#tpu.dimension_semantics<parallel>], iteration_bounds = array<i64: 1>, scalar_prefetch = 0 : i64, scratch_operands = 0 : i64, tpu.core_type = #tpu.core_type<tc>, window_params = [{transform_indices = @transform_0, window_bounds = array<i64: 8, 128>}, {pipeline_mode = #tpu.pipeline_mode<synchronous>, transform_indices = @transform_1, window_bounds = array<i64: 128, 128>}, {pipeline_mode = #tpu.pipeline_mode<synchronous>, transform_indices = @transform_2, window_bounds = array<i64: 1, 128>}, {pipeline_mode = #tpu.pipeline_mode<synchronous>, transform_indices = @transform_3, window_bounds = array<i64: 128, 10>}, {pipeline_mode = #tpu.pipeline_mode<synchronous>, transform_indices = @transform_4, window_bounds = array<i64: 1, 10>}, {transform_indices = @transform_5, window_bounds = array<i64: 8, 10>}]} {
    %c0 = arith.constant 0 : index
    %c0_0 = arith.constant 0 : index
    %0 = vector.load %arg1[%c0, %c0_0] : memref<8x128xf32, #tpu.memory_space<vmem>>, vector<8x128xf32>
    %c0_1 = arith.constant 0 : index
    %c0_2 = arith.constant 0 : index
    %1 = vector.load %arg2[%c0_1, %c0_2] : memref<128x128xf32, #tpu.memory_space<vmem>>, vector<128x128xf32>
    %cst = arith.constant dense<0.000000e+00> : vector<8x128xf32>
    %2 = tpu.matmul %0, %1, %cst {dimension_numbers = #tpu.dot_dimension_numbers<[1], [0], [0], [1], [0, 0, 1, 1], [], []>} : vector<8x128xf32>, vector<128x128xf32>, vector<8x128xf32> -> vector<8x128xf32>
    %c0_3 = arith.constant 0 : index
    %c0_4 = arith.constant 0 : index
    %3 = vector.load %arg3[%c0_3, %c0_4] : memref<1x128xf32, #tpu.memory_space<vmem>>, vector<1x128xf32>
    %4 = vector.broadcast %3 : vector<1x128xf32> to vector<8x128xf32>
    %5 = arith.addf %2, %4 : vector<8x128xf32>
    %cst_5 = arith.constant 0.000000e+00 : f32
    %6 = vector.broadcast %cst_5 : f32 to vector<8x128xf32>
    %7 = arith.maximumf %5, %6 : vector<8x128xf32>
    %c0_6 = arith.constant 0 : index
    %c0_7 = arith.constant 0 : index
    %8 = vector.load %arg4[%c0_6, %c0_7] : memref<128x10xf32, #tpu.memory_space<vmem>>, vector<128x10xf32>
    %cst_8 = arith.constant dense<0.000000e+00> : vector<8x10xf32>
    %9 = tpu.matmul %7, %8, %cst_8 {dimension_numbers = #tpu.dot_dimension_numbers<[1], [0], [0], [1], [0, 0, 1, 1], [], []>} : vector<8x128xf32>, vector<128x10xf32>, vector<8x10xf32> -> vector<8x10xf32>
    %c0_9 = arith.constant 0 : index
    %c0_10 = arith.constant 0 : index
    %10 = vector.load %arg5[%c0_9, %c0_10] : memref<1x10xf32, #tpu.memory_space<vmem>>, vector<1x10xf32>
    %11 = vector.broadcast %10 : vector<1x10xf32> to vector<8x10xf32>
    %12 = arith.addf %9, %11 : vector<8x10xf32>
    %c0_11 = arith.constant 0 : index
    %c0_12 = arith.constant 0 : index
    %13 = vector.load %arg6[%c0_11, %c0_12] : memref<8x10xf32, #tpu.memory_space<vmem>>, vector<8x10xf32>
    tpu.vector_store %arg6[%c0_11, %c0_12], %12 {strides = array<i32>} : memref<8x10xf32, #tpu.memory_space<vmem>>, vector<8x10xf32>,
    return
  }
  func.func @transform_0(%arg0: i32) -> (i32, i32) {
    %c0_i32 = arith.constant 0 : i32
    %c0_i32_0 = arith.constant 0 : i32
    return %arg0, %c0_i32 : i32, i32
  }
  func.func @transform_1(%arg0: i32) -> (i32, i32) {
    %c0_i32 = arith.constant 0 : i32
    %c0_i32_0 = arith.constant 0 : i32
    %c0_i32_1 = arith.constant 0 : i32
    return %c0_i32, %c0_i32_0 : i32, i32
  }
  func.func @transform_2(%arg0: i32) -> (i32, i32) {
    %c0_i32 = arith.constant 0 : i32
    %c0_i32_0 = arith.constant 0 : i32
    %c0_i32_1 = arith.constant 0 : i32
    return %c0_i32, %c0_i32_0 : i32, i32
  }
  func.func @transform_3(%arg0: i32) -> (i32, i32) {
    %c0_i32 = arith.constant 0 : i32
    %c0_i32_0 = arith.constant 0 : i32
    %c0_i32_1 = arith.constant 0 : i32
    return %c0_i32, %c0_i32_0 : i32, i32
  }
  func.func @transform_4(%arg0: i32) -> (i32, i32) {
    %c0_i32 = arith.constant 0 : i32
    %c0_i32_0 = arith.constant 0 : i32
    %c0_i32_1 = arith.constant 0 : i32
    return %c0_i32, %c0_i32_0 : i32, i32
  }
  func.func @transform_5(%arg0: i32) -> (i32, i32) {
    %c0_i32 = arith.constant 0 : i32
    %c0_i32_0 = arith.constant 0 : i32
    return %arg0, %c0_i32 : i32, i32
  }
}

</mosaic_0001>

<llo_original>
// kernel: linear_model_forward.1
$region0: #{linear_model_forward.1}
  #allocation0 [shape = 'u32[]', space=smem, size = 0x4, offset = 0x4, fixed_abs, tag = 'smem constant byte address 0x4 - core index']
  #allocation1 [shape = 'u32[144,128]{1,0:T(1,128)}', space=vmem, size = 0x12000, scoped, tag = 'internal scratch']
  %s0 = inlined_call_operand.vmem [shape: f32[8,128], index: 0, kind: input, shape index: {}]
  %s1 = inlined_call_operand.vmem [shape: f32[128,128], index: 1, kind: input, shape index: {}]
  %s2 = inlined_call_operand.vmem [shape: f32[1,128], index: 2, kind: input, shape index: {}]
  %s3 = inlined_call_operand.vmem [shape: f32[128,10], index: 3, kind: input, shape index: {}]
  %s4 = inlined_call_operand.vmem [shape: f32[1,10], index: 4, kind: input, shape index: {}]
  %s5 = inlined_call_operand.hbm [shape: f32[8,10], index: 5, kind: output, shape index: {}]
  %s6 = sld [smem:[#allocation0]]
  $region30: #{linear_model_forward.1} parent=0
    _
  %s8 = ssub.s32 1, %s6
  %s9 = scalar_select 0, %s8, %s6
  $region1: #{linear_model_forward.1} parent=0
    #allocation2 [shape = 'u8[4096]{0}', space=vmem, size = 0x1000, scoped, tag = 'output window, operand 0, single buffered']
    #allocation3 [shape = 's32[1]{0}', space=sflag, size = 0x4, scoped, tag = 'scoped memory for linear_model_forward.1']
    %10 = vsyncpa [#allocation3], 0
    // Predicated region
    $region2: #{linear_model_forward.1} parent=1 // pred_check
      _
    $region3: #{linear_model_forward.1} parent=1 // pred_check_branch
      %12 = sbr.rel (0) target = $region5
    $region4: #{linear_model_forward.1} parent=1 // pred_region
      _
    $region5: #{linear_model_forward.1} parent=1 // pred_fallthru
      _
    // Predicated region
    $region6: #{linear_model_forward.1} parent=1 // pred_check
      _
    $region7: #{linear_model_forward.1} parent=1 // pred_check_branch
      %14 = sbr.rel (0) target = $region9
    $region8: #{linear_model_forward.1} parent=1 // pred_region
      _
    $region9: #{linear_model_forward.1} parent=1 // pred_fallthru
      _
    // Predicated region
    $region10: #{linear_model_forward.1} parent=1 // pred_check
      _
    $region11: #{linear_model_forward.1} parent=1 // pred_check_branch
      %16 = sbr.rel (0) target = $region13
    $region12: #{linear_model_forward.1} parent=1 // pred_region
      _
    $region13: #{linear_model_forward.1} parent=1 // pred_fallthru
      _
    // Predicated region
    $region14: #{linear_model_forward.1} parent=1 // pred_check
      _
    $region15: #{linear_model_forward.1} parent=1 // pred_check_branch
      %18 = sbr.rel (0) target = $region17
    $region16: #{linear_model_forward.1} parent=1 // pred_region
      _
    $region17: #{linear_model_forward.1} parent=1 // pred_fallthru
      _
    // Predicated region
    $region18: #{linear_model_forward.1} parent=1 // pred_check
      _
    $region19: #{linear_model_forward.1} parent=1 // pred_check_branch
      %20 = sbr.rel (0) target = $region21
    $region20: #{linear_model_forward.1} parent=1 // pred_region
      _
    $region21: #{linear_model_forward.1} parent=1 // pred_fallthru
      _
    %v21 = vld [vmem:[%s0] sm:$0xff]
    %v22 = vld [vmem:[%s1] sm:$0xff]
    %v23 = vld [vmem:[%s1 + $0x8] sm:$0xff]
    %v24 = vld [vmem:[%s1 + $0x10] sm:$0xff]
    %v25 = vld [vmem:[%s1 + $0x18] sm:$0xff]
    %v26 = vld [vmem:[%s1 + $0x20] sm:$0xff]
    %v27 = vld [vmem:[%s1 + $0x28] sm:$0xff]
    %v28 = vld [vmem:[%s1 + $0x30] sm:$0xff]
    %v29 = vld [vmem:[%s1 + $0x38] sm:$0xff]
    %v30 = vld [vmem:[%s1 + $0x40] sm:$0xff]
    %v31 = vld [vmem:[%s1 + $0x48] sm:$0xff]
    %v32 = vld [vmem:[%s1 + $0x50] sm:$0xff]
    %v33 = vld [vmem:[%s1 + $0x58] sm:$0xff]
    %v34 = vld [vmem:[%s1 + $0x60] sm:$0xff]
    %v35 = vld [vmem:[%s1 + $0x68] sm:$0xff]
    %v36 = vld [vmem:[%s1 + $0x70] sm:$0xff]
    %v37 = vld [vmem:[%s1 + $0x78] sm:$0xff]
    %v38 = vld [vmem:[%s2] sm:$0x1]
    %v40 = vlaneseq
    %v41 = vshrl.u32 %v40, 7
    %v42 = vsub.s32 0, %v41
    %v43 = vrot.slane %v38, %v42
    %45 = vmatprep.subr.mxu0 0.0
    %46 = vmatpush1.msra.mxu0 %v37
    %47 = vmatprep.subr.mxu0 0.0
    %48 = vmatpush1.msra.mxu0 %v36
    %49 = vmatprep.subr.mxu0 0.0
    %50 = vmatpush1.msra.mxu0 %v35
    %51 = vmatprep.subr.mxu0 0.0
    %52 = vmatpush1.msra.mxu0 %v34
    %53 = vmatprep.subr.mxu0 0.0
    %54 = vmatpush1.msra.mxu0 %v33
    %55 = vmatprep.subr.mxu0 0.0
    %56 = vmatpush1.msra.mxu0 %v32
    %57 = vmatprep.subr.mxu0 0.0
    %58 = vmatpush1.msra.mxu0 %v31
    %59 = vmatprep.subr.mxu0 0.0
    %60 = vmatpush1.msra.mxu0 %v30
    %61 = vmatprep.subr.mxu0 0.0
    %62 = vmatpush1.msra.mxu0 %v29
    %63 = vmatprep.subr.mxu0 0.0
    %64 = vmatpush1.msra.mxu0 %v28
    %65 = vmatprep.subr.mxu0 0.0
    %66 = vmatpush1.msra.mxu0 %v27
    %67 = vmatprep.subr.mxu0 0.0
    %68 = vmatpush1.msra.mxu0 %v26
    %69 = vmatprep.subr.mxu0 0.0
    %70 = vmatpush1.msra.mxu0 %v25
    %71 = vmatprep.subr.mxu0 0.0
    %72 = vmatpush1.msra.mxu0 %v24
    %73 = vmatprep.subr.mxu0 0.0
    %74 = vmatpush1.msra.mxu0 %v23
    %75 = vmatprep.subr.mxu0 0.0
    %76 = vmatpush1.msra.mxu0 %v22
    %77 = vmatprep.subr.mxu0 0.0
    %78 = vmatpush2.msra.mxu0 0.0
    %79 = vmatprep.subr.mxu0 0.0
    %80 = vmatpush2.msra.mxu0 0.0
    %81 = vmatprep.subr.mxu0 0.0
    %82 = vmatpush2.msra.mxu0 0.0
    %83 = vmatprep.subr.mxu0 0.0
    %84 = vmatpush2.msra.mxu0 0.0
    %85 = vmatprep.subr.mxu0 0.0
    %86 = vmatpush2.msra.mxu0 0.0
    %87 = vmatprep.subr.mxu0 0.0
    %88 = vmatpush2.msra.mxu0 0.0
    %89 = vmatprep.subr.mxu0 0.0
    %90 = vmatpush2.msra.mxu0 0.0
    %91 = vmatprep.subr.mxu0 0.0
    %92 = vmatpush2.msra.mxu0 0.0
    %93 = vmatprep.subr.mxu0 0.0
    %94 = vmatpush2.msra.mxu0 0.0
    %95 = vmatprep.subr.mxu0 0.0
    %96 = vmatpush2.msra.mxu0 0.0
    %97 = vmatprep.subr.mxu0 0.0
    %98 = vmatpush2.msra.mxu0 0.0
    %99 = vmatprep.subr.mxu0 0.0
    %100 = vmatpush2.msra.mxu0 0.0
    %101 = vmatprep.subr.mxu0 0.0
    %102 = vmatpush2.msra.mxu0 0.0
    %103 = vmatprep.subr.mxu0 0.0
    %104 = vmatpush2.msra.mxu0 0.0
    %105 = vmatprep.subr.mxu0 0.0
    %106 = vmatpush2.msra.mxu0 0.0
    %107 = vmatprep.subr.mxu0 0.0
    %108 = vmatpush2.msra.mxu0 0.0
    %109 = vmatprep.mubr.f32.mxu0 0.0
    %110 = vmatmul.mubr.f32.gmra.mxu0 %v21
    %v111 = vpop.f32.mrf.mxu0
    %v112 = vadd.f32 %v43, %v111
    %v113 = vpop.f32.mrf.mxu0
    %114 = vdwg.mxu0
    %v115 = vmax.f32 %v112, 0.0
    %v116 = vld [vmem:[%s3] sm:$0xff]
    %v117 = vld [vmem:[%s3 + $0x8] sm:$0xff]
    %v118 = vld [vmem:[%s3 + $0x10] sm:$0xff]
    %v119 = vld [vmem:[%s3 + $0x18] sm:$0xff]
    %v120 = vld [vmem:[%s3 + $0x20] sm:$0xff]
    %v121 = vld [vmem:[%s3 + $0x28] sm:$0xff]
    %v122 = vld [vmem:[%s3 + $0x30] sm:$0xff]
    %v123 = vld [vmem:[%s3 + $0x38] sm:$0xff]
    %v124 = vld [vmem:[%s3 + $0x40] sm:$0xff]
    %v125 = vld [vmem:[%s3 + $0x48] sm:$0xff]
    %v126 = vld [vmem:[%s3 + $0x50] sm:$0xff]
    %v127 = vld [vmem:[%s3 + $0x58] sm:$0xff]
    %v128 = vld [vmem:[%s3 + $0x60] sm:$0xff]
    %v129 = vld [vmem:[%s3 + $0x68] sm:$0xff]
    %v130 = vld [vmem:[%s3 + $0x70] sm:$0xff]
    %v131 = vld [vmem:[%s3 + $0x78] sm:$0xff]
    %v132 = vld [vmem:[%s4] sm:$0x1]
    %v134 = vlaneseq
    %v135 = vshrl.u32 %v134, 7
    %v136 = vsub.s32 0, %v135
    %v137 = vrot.slane %v132, %v136
    %139 = vmatprep.subr.mxu0 0.0
    %140 = vmatpush1.msra.mxu0 %v131
    %141 = vmatprep.subr.mxu0 0.0
    %142 = vmatpush1.msra.mxu0 %v130
    %143 = vmatprep.subr.mxu0 0.0
    %144 = vmatpush1.msra.mxu0 %v129
    %145 = vmatprep.subr.mxu0 0.0
    %146 = vmatpush1.msra.mxu0 %v128
    %147 = vmatprep.subr.mxu0 0.0
    %148 = vmatpush1.msra.mxu0 %v127
    %149 = vmatprep.subr.mxu0 0.0
    %150 = vmatpush1.msra.mxu0 %v126
    %151 = vmatprep.subr.mxu0 0.0
    %152 = vmatpush1.msra.mxu0 %v125
    %153 = vmatprep.subr.mxu0 0.0
    %154 = vmatpush1.msra.mxu0 %v124
    %155 = vmatprep.subr.mxu0 0.0
    %156 = vmatpush1.msra.mxu0 %v123
    %157 = vmatprep.subr.mxu0 0.0
    %158 = vmatpush1.msra.mxu0 %v122
    %159 = vmatprep.subr.mxu0 0.0
    %160 = vmatpush1.msra.mxu0 %v121
    %161 = vmatprep.subr.mxu0 0.0
    %162 = vmatpush1.msra.mxu0 %v120
    %163 = vmatprep.subr.mxu0 0.0
    %164 = vmatpush1.msra.mxu0 %v119
    %165 = vmatprep.subr.mxu0 0.0
    %166 = vmatpush1.msra.mxu0 %v118
    %167 = vmatprep.subr.mxu0 0.0
    %168 = vmatpush1.msra.mxu0 %v117
    %169 = vmatprep.subr.mxu0 0.0
    %170 = vmatpush1.msra.mxu0 %v116
    %171 = vmatprep.subr.mxu0 0.0
    %172 = vmatpush2.msra.mxu0 0.0
    %173 = vmatprep.subr.mxu0 0.0
    %174 = vmatpush2.msra.mxu0 0.0
    %175 = vmatprep.subr.mxu0 0.0
    %176 = vmatpush2.msra.mxu0 0.0
    %177 = vmatprep.subr.mxu0 0.0
    %178 = vmatpush2.msra.mxu0 0.0
    %179 = vmatprep.subr.mxu0 0.0
    %180 = vmatpush2.msra.mxu0 0.0
    %181 = vmatprep.subr.mxu0 0.0
    %182 = vmatpush2.msra.mxu0 0.0
    %183 = vmatprep.subr.mxu0 0.0
    %184 = vmatpush2.msra.mxu0 0.0
    %185 = vmatprep.subr.mxu0 0.0
    %186 = vmatpush2.msra.mxu0 0.0
    %187 = vmatprep.subr.mxu0 0.0
    %188 = vmatpush2.msra.mxu0 0.0
    %189 = vmatprep.subr.mxu0 0.0
    %190 = vmatpush2.msra.mxu0 0.0
    %191 = vmatprep.subr.mxu0 0.0
    %192 = vmatpush2.msra.mxu0 0.0
    %193 = vmatprep.subr.mxu0 0.0
    %194 = vmatpush2.msra.mxu0 0.0
    %195 = vmatprep.subr.mxu0 0.0
    %196 = vmatpush2.msra.mxu0 0.0
    %197 = vmatprep.subr.mxu0 0.0
    %198 = vmatpush2.msra.mxu0 0.0
    %199 = vmatprep.subr.mxu0 0.0
    %200 = vmatpush2.msra.mxu0 0.0
    %201 = vmatprep.subr.mxu0 0.0
    %202 = vmatpush2.msra.mxu0 0.0
    %203 = vmatprep.mubr.f32.mxu0 0.0
    %204 = vmatmul.mubr.f32.gmra.mxu0 %v115
    %v205 = vpop.f32.mrf.mxu0
    %v206 = vadd.f32 %v137, %v205
    %v207 = vpop.f32.mrf.mxu0
    %208 = vdwg.mxu0
    %vm209 = vcmask 80896
    %210 = vst.msk [vmem:[#allocation2] sm:$0xff] %vm209, %v206
    // Predicated region
    $region22: #{linear_model_forward.1} parent=1 // pred_check
      _
    $region23: #{linear_model_forward.1} parent=1 // pred_check_branch
      %212 = sbr.rel (0) target = $region25
    $region24: #{linear_model_forward.1} parent=1 // pred_region
      %s214 = ssub.s32 128, 128
      %215 = vsyncadd [#allocation3], %s214
      %s217 = sshll.u32 [#allocation2], 4
      %s218 = int_to_ptr.vmem [resolvable:$true] %s217
      %220 = dma.vmem_to_hbm [thread:$0]  %s218, 128, %s5, [#allocation3]
    $region25: #{linear_model_forward.1} parent=1 // pred_fallthru
      _
    // Predicated region
    $region26: #{linear_model_forward.1} parent=1 // pred_check
      _
    $region27: #{linear_model_forward.1} parent=1 // pred_check_branch
      %222 = sbr.rel (0) target = $region29
    $region28: #{linear_model_forward.1} parent=1 // pred_region
      %223 = dma.done [#allocation3], 128
    $region29: #{linear_model_forward.1} parent=1 // pred_fallthru
      _
    %224 = vsyncpa [#allocation3], 1

</llo_original>
